<compile_context>
chip_gen: v7x
topology: tpu7x:2x2x1
jax: 0.10.0
libtpu: 0.0.40
codegen_flags: <defaults>
</compile_context>

<pallas_src>
import math

import jax
import jax.numpy as jnp
from jax import lax
from jax.experimental import pallas as pl
from jax.experimental.pallas import tpu as pltpu


# ----------------------------- Pallas kernel ------------------------------ #
def noisy_linear_kernel(x_ref, wmu_ref, wsig_ref, eps_in_ref, eps_out_ref,
                        bmu_ref, bsig_ref, beps_ref, o_ref):
    k = pl.program_id(2)                      # K (reduction) axis, last
    tk, tn = wmu_ref.shape

    @pl.when(k == 0)
    def _():
        # Initialize the resident f32 output block with the effective bias
        # (padded bias entries are zero, padded rows are sliced off outside).
        b_eff = bmu_ref[...] + bsig_ref[...] * beps_ref[...]          # (1, tn)
        o_ref[...] = jnp.broadcast_to(b_eff, o_ref.shape)

    # Effective weight tile in MXU-native (TK, TN) layout:
    #   w_eff = W_mu^T + W_sigma^T * (eps_in (x) eps_out)
    # eps_in tile is a (TK, 1) column sliced from the resident full column,
    # eps_out tile a (1, TN) row, so the outer product is a pure VPU
    # broadcast-multiply (no transpose, no XLU) hidden under the weight DMA.
    k_start = pl.multiple_of(k * tk, 128)
    eps_col = eps_in_ref[pl.ds(k_start, tk), :]                        # (tk, 1) f32
    w_eps = eps_col * eps_out_ref[...]                                 # (tk, tn) f32
    w_eff = (wmu_ref[...].astype(jnp.float32)
             + wsig_ref[...].astype(jnp.float32) * w_eps)              # (tk, tn) f32

    # x (TM, TK) @ w_eff (TK, TN) -> (TM, TN); RHS already (K, N): no `.T`.
    o_ref[...] += jnp.dot(x_ref[...], w_eff,
                          preferred_element_type=jnp.float32)


# ------------------------------- helpers ----------------------------------- #
def _round_up(x, m):
    return ((x + m - 1) // m) * m


def _pick_tile(dim_pad, max_tile, align, prefer_split=False):
    """Largest multiple-of-`align` divisor of `dim_pad` that is <= max_tile.

    With prefer_split, avoid the full-extent tile when a smaller divisor
    exists, so the corresponding "parallel" grid axis has extent >= 2
    (keeps both TensorCores busy on v7x megacore)."""
    candidates = [t for t in range(align, dim_pad + 1, align)
                  if dim_pad % t == 0 and t <= max_tile]
    if prefer_split:
        split = [t for t in candidates if t < dim_pad]
        if split:
            return max(split)
    return max(candidates)


# ------------------------- one-time parameter prep -------------------------- #
def prepare_noisy_linear_params(weight_mu, weight_sigma, eps_in, eps_out,
                                bias_mu, bias_sigma, bias_epsilon,
                                *, weight_dtype=jnp.bfloat16):
    """One-time (per reset_noise) packing into TPU-friendly tensors.

    Weights are zero-padded to (8,128)-aligned shapes, transposed to (K, N)
    and cast to `weight_dtype` (bf16 by default) ONCE, so the per-call
    forward only pads the activations."""
    out_f, in_f = weight_mu.shape
    in_pad, out_pad = _round_up(in_f, 128), _round_up(out_f, 128)
    f32 = jnp.float32

    def pad_t(w):   # (out_f, in_f) -> (in_pad, out_pad) weight_dtype
        w_t = jnp.transpose(w.astype(f32)).astype(weight_dtype)
        return jnp.zeros((in_pad, out_pad), weight_dtype).at[:in_f, :out_f].set(w_t)

    def pad_row(v):  # (out_f,) -> (1, out_pad) f32
        return jnp.zeros((1, out_pad), f32).at[0, :out_f].set(v.astype(f32))

    return dict(
        in_features=in_f,
        out_features=out_f,
        weight_mu_t=pad_t(weight_mu),
        weight_sigma_t=pad_t(weight_sigma),
        eps_in_col=jnp.zeros((in_pad, 1), f32).at[:in_f, 0].set(eps_in.astype(f32)),
        eps_out_row=pad_row(eps_out),
        bias_mu_row=pad_row(bias_mu),
        bias_sigma_row=pad_row(bias_sigma),
        bias_eps_row=pad_row(bias_epsilon),
    )


# ------------------------------- forward ----------------------------------- #
def noisy_linear_forward(x, prepared, *, tm_max=256, tn_max=512, tk_max=512):
    """x: (B, in_features) -> (B, out_features), f32."""
    f32 = jnp.float32
    B, in_f = x.shape
    assert in_f == prepared["in_features"], "in_features mismatch"
    out_f = prepared["out_features"]

    wmu_t = prepared["weight_mu_t"]
    wsig_t = prepared["weight_sigma_t"]
    in_pad, out_pad = wmu_t.shape

    # Tile sizes: lane-aligned divisors of the padded dims; the N tile is
    # capped so the parallel grid extent is >= 2 whenever possible (v7x).
    tk = _pick_tile(in_pad, tk_max, 128)
    tn = _pick_tile(out_pad, tn_max, 128, prefer_split=True)
    b_pad = _round_up(B, 8)
    if b_pad > tm_max:
        tm = _round_up(tm_max, 8)
        b_pad = _round_up(b_pad, tm)
    else:
        tm = b_pad

    # Only the activations are padded per call (zero K-padding is exact:
    # padded K rows of the weights and padded eps_in entries are zero too).
    if (b_pad, in_pad) == tuple(x.shape) and x.dtype == f32:
        x_p = x
    else:
        x_p = jnp.zeros((b_pad, in_pad), f32).at[:B, :in_f].set(x.astype(f32))

    grid = (b_pad // tm, out_pad // tn, in_pad // tk)   # (M, N, K-reduction last)

    w_bytes = jnp.dtype(wmu_t.dtype).itemsize
    cost = pl.CostEstimate(
        flops=2 * b_pad * in_pad * out_pad + 3 * out_pad * in_pad,
        transcendentals=0,
        bytes_accessed=(4 * b_pad * in_pad                      # x
                        + 2 * w_bytes * out_pad * in_pad        # W_mu^T + W_sigma^T
                        + 4 * b_pad * out_pad                   # out
                        + 4 * (in_pad + 4 * out_pad)),          # eps / bias vectors
    )

    out_p = pl.pallas_call(
        noisy_linear_kernel,
        out_shape=jax.ShapeDtypeStruct((b_pad, out_pad), f32),
        grid_spec=pltpu.PrefetchScalarGridSpec(
            num_scalar_prefetch=0,
            grid=grid,
            in_specs=[
                pl.BlockSpec((tm, tk),    lambda i, j, k: (i, k)),   # x
                pl.BlockSpec((tk, tn),    lambda i, j, k: (k, j)),   # W_mu^T   (bf16)
                pl.BlockSpec((tk, tn),    lambda i, j, k: (k, j)),   # W_sigma^T(bf16)
                pl.BlockSpec((in_pad, 1), lambda i, j, k: (0, 0)),   # eps_in column (resident)
                pl.BlockSpec((1, tn),     lambda i, j, k: (0, j)),   # eps_out row
                pl.BlockSpec((1, tn),     lambda i, j, k: (0, j)),   # bias_mu row
                pl.BlockSpec((1, tn),     lambda i, j, k: (0, j)),   # bias_sigma row
                pl.BlockSpec((1, tn),     lambda i, j, k: (0, j)),   # bias_epsilon row
            ],
            out_specs=pl.BlockSpec((tm, tn), lambda i, j, k: (i, j)),
        ),
        compiler_params=pltpu.CompilerParams(
            dimension_semantics=("parallel", "parallel", "arbitrary"),
            vmem_limit_bytes=48 * 1024 * 1024),
        cost_estimate=cost,
    )(x_p, wmu_t, wsig_t,
      prepared["eps_in_col"], prepared["eps_out_row"],
      prepared["bias_mu_row"], prepared["bias_sigma_row"],
      prepared["bias_eps_row"])

    return out_p[:B, :out_f]


# ------------------------ deterministic parameter init --------------------- #
def scale_noise(key, size):
    """f(x) = sign(x) * sqrt(|x|) with x ~ N(0,1)."""
    x = jax.random.normal(key, (size,), dtype=jnp.float32)
    return jnp.sign(x) * jnp.sqrt(jnp.abs(x))


def init_noisy_linear(key, in_features, out_features, std_init=0.5):
    k_wmu, k_bmu, k_eps_in, k_eps_out = jax.random.split(key, 4)
    mu_range = 1.0 / math.sqrt(in_features)

    weight_mu = jax.random.uniform(
        k_wmu, (out_features, in_features), jnp.float32,
        minval=-mu_range, maxval=mu_range)
    weight_sigma = jnp.full((out_features, in_features),
                            std_init / math.sqrt(in_features), jnp.float32)
    bias_mu = jax.random.uniform(
        k_bmu, (out_features,), jnp.float32,
        minval=-mu_range, maxval=mu_range)
    bias_sigma = jnp.full((out_features,),
                          std_init / math.sqrt(out_features), jnp.float32)

    eps_in = scale_noise(k_eps_in, in_features)
    eps_out = scale_noise(k_eps_out, out_features)
    # Factored noise kept as vectors; weight_epsilon == outer(eps_out, eps_in)
    # is reconstructed per tile inside the kernel (same values reset_noise
    # writes into the torch buffer).
    return dict(weight_mu=weight_mu, weight_sigma=weight_sigma,
                eps_in=eps_in, eps_out=eps_out,
                bias_mu=bias_mu, bias_sigma=bias_sigma,
                bias_epsilon=eps_out)


# ------------------------------ reference ----------------------------------- #
def noisy_linear_ref(x, weight_mu, weight_sigma, eps_in, eps_out,
                     bias_mu, bias_sigma, bias_epsilon):
    w_eps = jnp.outer(eps_out, eps_in)            # epsilon_out.ger(epsilon_in)
    w_eff = weight_mu + weight_sigma * w_eps
    b_eff = bias_mu + bias_sigma * bias_epsilon
    return jnp.dot(x, w_eff.T, precision=lax.Precision.HIGHEST) + b_eff


if __name__ == "__main__":
    key = jax.random.PRNGKey(0)
    k_param, k_x = jax.random.split(key)

    # Small, non-128-aligned shapes to exercise padding + a (1, 2, 2) grid.
    batch, in_features, out_features = 8, 160, 192
    params = init_noisy_linear(k_param, in_features, out_features, std_init=0.5)
    x = jax.random.normal(k_x, (batch, in_features), dtype=jnp.float32)

    # One-time packing (the analogue of the torch buffers at forward time).
    prepared = prepare_noisy_linear_params(
        params["weight_mu"], params["weight_sigma"],
        params["eps_in"], params["eps_out"],
        params["bias_mu"], params["bias_sigma"], params["bias_epsilon"])

    # Small tile caps for the demo so the grid has >1 N and K step;
    # real layers use the defaults (tm<=256, tn<=512, tk<=512).
    y = noisy_linear_forward(x, prepared, tn_max=128, tk_max=128)
    y = jax.block_until_ready(y)
    assert y.shape == (batch, out_features)

    # (1) Exact-path check: same bf16-quantized weights, f32 math everywhere.
    wmu_q = prepared["weight_mu_t"][:in_features, :out_features].astype(jnp.float32).T
    wsig_q = prepared["weight_sigma_t"][:in_features, :out_features].astype(jnp.float32).T
    y_ref_q = noisy_linear_ref(
        x, wmu_q, wsig_q, params["eps_in"], params["eps_out"],
        params["bias_mu"], params["bias_sigma"], params["bias_epsilon"])
    assert jnp.allclose(y, y_ref_q, atol=2e-3, rtol=2e-3), \
        "mismatch vs bf16-weight reference"

    # (2) Module-semantics check vs the original f32 parameters; the looser
    #     tolerance documents the accepted bf16 weight-storage precision.
    y_ref = noisy_linear_ref(
        x, params["weight_mu"], params["weight_sigma"],
        params["eps_in"], params["eps_out"],
        params["bias_mu"], params["bias_sigma"], params["bias_epsilon"])
    assert jnp.allclose(y, y_ref, atol=5e-2, rtol=5e-2), \
        "mismatch vs f32 module reference"

    print("KERNEL_OK")
</pallas_src>

<mosaic_0001>
module attributes {stable_mosaic.version = 11 : i64} {
  func.func @noisy_linear_kernel(%arg0: i32, %arg1: i32, %arg2: i32, %arg3: memref<8x128xf32, #tpu.memory_space<vmem>>, %arg4: memref<128x128xbf16, #tpu.memory_space<vmem>>, %arg5: memref<128x128xbf16, #tpu.memory_space<vmem>>, %arg6: memref<256x1xf32, #tpu.memory_space<vmem>>, %arg7: memref<1x128xf32, #tpu.memory_space<vmem>>, %arg8: memref<1x128xf32, #tpu.memory_space<vmem>>, %arg9: memref<1x128xf32, #tpu.memory_space<vmem>>, %arg10: memref<1x128xf32, #tpu.memory_space<vmem>>, %arg11: memref<8x128xf32, #tpu.memory_space<vmem>>) attributes {dimension_semantics = [#tpu.dimension_semantics<parallel>, #tpu.dimension_semantics<parallel>, #tpu.dimension_semantics<arbitrary>], iteration_bounds = array<i64: 1, 2, 2>, scalar_prefetch = 0 : i64, scratch_operands = 0 : i64, tpu.core_type = #tpu.core_type<tc>, window_params = [{transform_indices = @transform_0, window_bounds = array<i64: 8, 128>}, {transform_indices = @transform_1, window_bounds = array<i64: 128, 128>}, {transform_indices = @transform_2, window_bounds = array<i64: 128, 128>}, {pipeline_mode = #tpu.pipeline_mode<synchronous>, transform_indices = @transform_3, window_bounds = array<i64: 256, 1>}, {transform_indices = @transform_4, window_bounds = array<i64: 1, 128>}, {transform_indices = @transform_5, window_bounds = array<i64: 1, 128>}, {transform_indices = @transform_6, window_bounds = array<i64: 1, 128>}, {transform_indices = @transform_7, window_bounds = array<i64: 1, 128>}, {transform_indices = @transform_8, window_bounds = array<i64: 8, 128>}]} {
    %c0_i32 = arith.constant 0 : i32
    %0 = arith.cmpi eq, %arg2, %c0_i32 : i32
    %1 = arith.extui %0 : i1 to i32
    %c0_i32_0 = arith.constant 0 : i32
    %2 = arith.cmpi ne, %1, %c0_i32_0 : i32
    scf.if %2 {
      %c0_13 = arith.constant 0 : index
      %c0_14 = arith.constant 0 : index
      %22 = vector.load %arg8[%c0_13, %c0_14] : memref<1x128xf32, #tpu.memory_space<vmem>>, vector<1x128xf32>
      %c0_15 = arith.constant 0 : index
      %c0_16 = arith.constant 0 : index
      %23 = vector.load %arg9[%c0_15, %c0_16] : memref<1x128xf32, #tpu.memory_space<vmem>>, vector<1x128xf32>
      %c0_17 = arith.constant 0 : index
      %c0_18 = arith.constant 0 : index
      %24 = vector.load %arg10[%c0_17, %c0_18] : memref<1x128xf32, #tpu.memory_space<vmem>>, vector<1x128xf32>
      %25 = arith.mulf %23, %24 : vector<1x128xf32>
      %26 = arith.addf %22, %25 : vector<1x128xf32>
      %27 = vector.shape_cast %26 : vector<1x128xf32> to vector<1x128xf32>
      %28 = vector.broadcast %27 : vector<1x128xf32> to vector<8x128xf32>
      %c0_19 = arith.constant 0 : index
      %c0_20 = arith.constant 0 : index
      %29 = vector.load %arg11[%c0_19, %c0_20] : memref<8x128xf32, #tpu.memory_space<vmem>>, vector<8x128xf32>
      tpu.vector_store %arg11[%c0_19, %c0_20], %28 {strides = array<i32>} : memref<8x128xf32, #tpu.memory_space<vmem>>, vector<8x128xf32>,
    } else {
    }
    %c128_i32 = arith.constant 128 : i32
    %3 = arith.muli %arg2, %c128_i32 : i32
    %4 = tpu.assume_multiple %3, 128 : i32
    %5 = arith.index_cast %4 : i32 to index
    %c0 = arith.constant 0 : index
    %6 = vector.load %arg6[%5, %c0] : memref<256x1xf32, #tpu.memory_space<vmem>>, vector<128x1xf32>
    %c0_1 = arith.constant 0 : index
    %c0_2 = arith.constant 0 : index
    %7 = vector.load %arg7[%c0_1, %c0_2] : memref<1x128xf32, #tpu.memory_space<vmem>>, vector<1x128xf32>
    %8 = vector.broadcast %6 : vector<128x1xf32> to vector<128x128xf32>
    %9 = vector.broadcast %7 : vector<1x128xf32> to vector<128x128xf32>
    %10 = arith.mulf %8, %9 : vector<128x128xf32>
    %c0_3 = arith.constant 0 : index
    %c0_4 = arith.constant 0 : index
    %11 = vector.load %arg4[%c0_3, %c0_4] : memref<128x128xbf16, #tpu.memory_space<vmem>>, vector<128x128xbf16>
    %12 = arith.extf %11 : vector<128x128xbf16> to vector<128x128xf32>
    %c0_5 = arith.constant 0 : index
    %c0_6 = arith.constant 0 : index
    %13 = vector.load %arg5[%c0_5, %c0_6] : memref<128x128xbf16, #tpu.memory_space<vmem>>, vector<128x128xbf16>
    %14 = arith.extf %13 : vector<128x128xbf16> to vector<128x128xf32>
    %15 = arith.mulf %14, %10 : vector<128x128xf32>
    %16 = arith.addf %12, %15 : vector<128x128xf32>
    %c0_7 = arith.constant 0 : index
    %c0_8 = arith.constant 0 : index
    %17 = vector.load %arg11[%c0_7, %c0_8] : memref<8x128xf32, #tpu.memory_space<vmem>>, vector<8x128xf32>
    %c0_9 = arith.constant 0 : index
    %c0_10 = arith.constant 0 : index
    %18 = vector.load %arg3[%c0_9, %c0_10] : memref<8x128xf32, #tpu.memory_space<vmem>>, vector<8x128xf32>
    %cst = arith.constant dense<0.000000e+00> : vector<8x128xf32>
    %19 = tpu.matmul %18, %16, %cst {dimension_numbers = #tpu.dot_dimension_numbers<[1], [0], [0], [1], [0, 0, 1, 1], [], []>} : vector<8x128xf32>, vector<128x128xf32>, vector<8x128xf32> -> vector<8x128xf32>
    %20 = arith.addf %17, %19 : vector<8x128xf32>
    %c0_11 = arith.constant 0 : index
    %c0_12 = arith.constant 0 : index
    %21 = vector.load %arg11[%c0_11, %c0_12] : memref<8x128xf32, #tpu.memory_space<vmem>>, vector<8x128xf32>
    tpu.vector_store %arg11[%c0_11, %c0_12], %20 {strides = array<i32>} : memref<8x128xf32, #tpu.memory_space<vmem>>, vector<8x128xf32>,
    return
  }
  func.func @transform_0(%arg0: i32, %arg1: i32, %arg2: i32) -> (i32, i32) {
    %c0_i32 = arith.constant 0 : i32
    return %arg0, %arg2 : i32, i32
  }
  func.func @transform_1(%arg0: i32, %arg1: i32, %arg2: i32) -> (i32, i32) {
    %c0_i32 = arith.constant 0 : i32
    return %arg2, %arg1 : i32, i32
  }
  func.func @transform_2(%arg0: i32, %arg1: i32, %arg2: i32) -> (i32, i32) {
    %c0_i32 = arith.constant 0 : i32
    return %arg2, %arg1 : i32, i32
  }
  func.func @transform_3(%arg0: i32, %arg1: i32, %arg2: i32) -> (i32, i32) {
    %c0_i32 = arith.constant 0 : i32
    %c0_i32_0 = arith.constant 0 : i32
    %c0_i32_1 = arith.constant 0 : i32
    return %c0_i32, %c0_i32_0 : i32, i32
  }
  func.func @transform_4(%arg0: i32, %arg1: i32, %arg2: i32) -> (i32, i32) {
    %c0_i32 = arith.constant 0 : i32
    %c0_i32_0 = arith.constant 0 : i32
    return %c0_i32, %arg1 : i32, i32
  }
  func.func @transform_5(%arg0: i32, %arg1: i32, %arg2: i32) -> (i32, i32) {
    %c0_i32 = arith.constant 0 : i32
    %c0_i32_0 = arith.constant 0 : i32
    return %c0_i32, %arg1 : i32, i32
  }
  func.func @transform_6(%arg0: i32, %arg1: i32, %arg2: i32) -> (i32, i32) {
    %c0_i32 = arith.constant 0 : i32
    %c0_i32_0 = arith.constant 0 : i32
    return %c0_i32, %arg1 : i32, i32
  }
  func.func @transform_7(%arg0: i32, %arg1: i32, %arg2: i32) -> (i32, i32) {
    %c0_i32 = arith.constant 0 : i32
    %c0_i32_0 = arith.constant 0 : i32
    return %c0_i32, %arg1 : i32, i32
  }
  func.func @transform_8(%arg0: i32, %arg1: i32, %arg2: i32) -> (i32, i32) {
    %c0_i32 = arith.constant 0 : i32
    return %arg0, %arg1 : i32, i32
  }
}

</mosaic_0001>

<llo_original>
// kernel: tpu_custom_call.1
$region0: #{tpu_custom_call.1}
  #allocation0 [shape = 'u32[]', space=smem, size = 0x4, offset = 0x4, fixed_abs, tag = 'smem constant byte address 0x4 - core index']
  #allocation1 [shape = 'u32[144,128]{1,0:T(1,128)}', space=vmem, size = 0x12000, scoped, tag = 'internal scratch']
  %s0 = inlined_call_operand.hbm [shape: f32[8,256], index: 0, kind: input, shape index: {}]
  %s1 = inlined_call_operand.vmem [shape: bf16[256,256], index: 1, kind: input, shape index: {}]
  %s2 = inlined_call_operand.hbm [shape: bf16[256,256], index: 2, kind: input, shape index: {}]
  %s3 = inlined_call_operand.vmem [shape: f32[256,1], index: 3, kind: input, shape index: {}]
  %s4 = inlined_call_operand.vmem [shape: f32[1,256], index: 4, kind: input, shape index: {}]
  %s5 = inlined_call_operand.vmem [shape: f32[1,256], index: 5, kind: input, shape index: {}]
  %s6 = inlined_call_operand.vmem [shape: f32[1,256], index: 6, kind: input, shape index: {}]
  %s7 = inlined_call_operand.vmem [shape: f32[1,256], index: 7, kind: input, shape index: {}]
  %s8 = inlined_call_operand.hbm [shape: f32[8,256], index: 8, kind: output, shape index: {}]
  %s9 = sld [smem:[#allocation0]]
  $region118: #{tpu_custom_call.1} parent=0
    _
  %s11 = ssub.s32 1, %s9
  %s12 = scalar_select 0, %s11, %s9
  $region1: #{tpu_custom_call.1} parent=0
    #allocation2 [shape = 'u8[8192]{0}', space=vmem, size = 0x2000, scoped, tag = 'input window, operand 0']
    #allocation3 [shape = 's32[2]{0}', space=sflag, size = 0x8, scoped, tag = 'scoped memory for tpu_custom_call.1']
    #allocation4 [shape = 's32[2]{0}', space=sflag, size = 0x8, scoped, tag = 'scoped memory for tpu_custom_call.1']
    #allocation5 [shape = 'u8[65536]{0}', space=vmem, size = 0x10000, scoped, tag = 'input window, operand 1']
    #allocation6 [shape = 'u8[65536]{0}', space=vmem, size = 0x10000, scoped, tag = 'input window, operand 2']
    #allocation7 [shape = 's32[2]{0}', space=sflag, size = 0x8, scoped, tag = 'scoped memory for tpu_custom_call.1']
    #allocation8 [shape = 'u8[8192]{0}', space=vmem, size = 0x2000, scoped, tag = 'output window, operand 0']
    %13 = vsyncpa [#allocation3], 0
    %s14 = scalar_lea.sflag [#allocation3], 1
    %15 = vsyncpa %s14, 0
    %16 = vsyncpa [#allocation7], 0
    %s17 = scalar_lea.sflag [#allocation7], 1
    %18 = vsyncpa %s17, 0
    %19 = vsyncpa [#allocation4], 0
    %s20 = scalar_lea.sflag [#allocation4], 1
    %21 = vsyncpa %s20, 0
    loop: start=0, step=1, limit=6
    $region2: #{tpu_custom_call.1} parent=1 // loop_pre_header
      _
    $region3: #{tpu_custom_call.1} parent=1 // loop_header
      %s23 = sphi 0, %s27
      %p24 = scmp.ge.s32.totalorder %s23, 6
      %s30 = sphi 0, %s49
      %s31 = sphi 0, %s45
      %s32 = sphi 0, %s41
      %s33 = sphi 0, %s30
      %s34 = sphi 0, %s31
      %s35 = sphi 0, %s32
      %s36 = sphi 0, %s33
      %s37 = sphi 0, %s34
      %s38 = sphi 0, %s35
      %s54 = sphi 0, %s56
      %s57 = sphi 0, %s54
      %s58 = sphi 0, %s57
      %s74 = sphi 0, %s58
      %s82 = sphi 0, %s84
      %s85 = sphi 0, %s82
      %s86 = sphi 0, %s85
      %s102 = sphi 0, %s86
      %s110 = sphi 0, %s112
      %s113 = sphi 0, %s110
      %s114 = sphi 0, %s113
      %s130 = sphi 0, %s114
      %s134 = sphi 0, %s134
      %s136 = sphi 0, %s134
      %s137 = sphi 0, %s136
      %s151 = sphi 0, %s137
      %s157 = sphi 0, %s159
      %s160 = sphi 0, %s157
      %s161 = sphi 0, %s160
      %s177 = sphi 0, %s161
      %s183 = sphi 0, %s185
      %s186 = sphi 0, %s183
      %s187 = sphi 0, %s186
      %s203 = sphi 0, %s187
      %s209 = sphi 0, %s211
      %s212 = sphi 0, %s209
      %s213 = sphi 0, %s212
      %s229 = sphi 0, %s213
      %s235 = sphi 0, %s237
      %s238 = sphi 0, %s235
      %s239 = sphi 0, %s238
      %s255 = sphi 0, %s239
      %s263 = sphi 0, %s265
      %s266 = sphi 0, %s263
      %s267 = sphi 0, %s266
      %s283 = sphi 0, %s267
    $region4: #{tpu_custom_call.1} parent=1 // loop_header_branch
      %26 = sbr.rel (%p24) target = $region8
    $region5: #{tpu_custom_call.1} parent=1 // loop_body
      %s28 = ssub.s32 %s23, 1
      %s29 = ssub.s32 %s23, 2
      %s39 = sadd.s32 1, %s32
      %p40 = scmp.ge.s32.totalorder %s39, 2
      %s41 = scalar_select %p40, 0, %s39
      %s42 = sadd.s32 1, %s31
      %s43 = scalar_select %p40, %s42, %s31
      %p44 = scmp.ge.s32.totalorder %s43, 2
      %s45 = scalar_select %p44, 0, %s43
      %s46 = sadd.s32 1, %s30
      %s47 = scalar_select %p44, %s46, %s30
      %p48 = scmp.ge.s32.totalorder %s47, 1
      %s49 = scalar_select %p48, 0, %s47
      %s50 = ssub.s32 %s30, %s49
      %s51 = ssub.s32 %s32, %s41
      %s52 = sor.u32 %s50, %s51
      %p53 = scmp.eq.s32.totalorder %s52, 0
      %s55 = sadd.s32 %s54, 1
      %s56 = scalar_select %p53, %s54, %s55
      %p59 = pneg %p53
      %p60 = scmp.eq.s32.totalorder %s23, 3
      %p61 = por %p59, %p60
      %p62 = scmp.ne.s32.totalorder %s54, %s57
      %p63 = scmp.eq.s32.totalorder %s23, 0
      %p64 = por %p62, %p63
      %p65 = scmp.ne.s32.totalorder %s54, %s57
      %p66 = scmp.eq.s32.totalorder %s28, 3
      %p67 = por %p65, %p66
      %p68 = scmp.ne.s32.totalorder %s57, %s58
      %p69 = scmp.eq.s32.totalorder %s28, 0
      %p70 = por %p68, %p69
      %p71 = scmp.ne.s32.totalorder %s57, %s58
      %p72 = scmp.eq.s32.totalorder %s29, 3
      %p73 = por %p71, %p72
      %p75 = scmp.ne.s32.totalorder %s58, %s74
      %p76 = scmp.eq.s32.totalorder %s29, 0
      %p77 = por %p75, %p76
      %s78 = ssub.s32 %s32, %s41
      %s79 = ssub.s32 %s31, %s45
      %s80 = sor.u32 %s78, %s79
      %p81 = scmp.eq.s32.totalorder %s80, 0
      %s83 = sadd.s32 %s82, 1
      %s84 = scalar_select %p81, %s82, %s83
      %p87 = pneg %p81
      %p88 = scmp.eq.s32.totalorder %s23, 3
      %p89 = por %p87, %p88
      %p90 = scmp.ne.s32.totalorder %s82, %s85
      %p91 = scmp.eq.s32.totalorder %s23, 0
      %p92 = por %p90, %p91
      %p93 = scmp.ne.s32.totalorder %s82, %s85
      %p94 = scmp.eq.s32.totalorder %s28, 3
      %p95 = por %p93, %p94
      %p96 = scmp.ne.s32.totalorder %s85, %s86
      %p97 = scmp.eq.s32.totalorder %s28, 0
      %p98 = por %p96, %p97
      %p99 = scmp.ne.s32.totalorder %s85, %s86
      %p100 = scmp.eq.s32.totalorder %s29, 3
      %p101 = por %p99, %p100
      %p103 = scmp.ne.s32.totalorder %s86, %s102
      %p104 = scmp.eq.s32.totalorder %s29, 0
      %p105 = por %p103, %p104
      %s106 = ssub.s32 %s32, %s41
      %s107 = ssub.s32 %s31, %s45
      %s108 = sor.u32 %s106, %s107
      %p109 = scmp.eq.s32.totalorder %s108, 0
      %s111 = sadd.s32 %s110, 1
      %s112 = scalar_select %p109, %s110, %s111
      %p115 = pneg %p109
      %p116 = scmp.eq.s32.totalorder %s23, 3
      %p117 = por %p115, %p116
      %p118 = scmp.ne.s32.totalorder %s110, %s113
      %p119 = scmp.eq.s32.totalorder %s23, 0
      %p120 = por %p118, %p119
      %p121 = scmp.ne.s32.totalorder %s110, %s113
      %p122 = scmp.eq.s32.totalorder %s28, 3
      %p123 = por %p121, %p122
      %p124 = scmp.ne.s32.totalorder %s113, %s114
      %p125 = scmp.eq.s32.totalorder %s28, 0
      %p126 = por %p124, %p125
      %p127 = scmp.ne.s32.totalorder %s113, %s114
      %p128 = scmp.eq.s32.totalorder %s29, 3
      %p129 = por %p127, %p128
      %p131 = scmp.ne.s32.totalorder %s114, %s130
      %p132 = scmp.eq.s32.totalorder %s29, 0
      %p133 = por %p131, %p132
      %s135 = sadd.s32 %s134, 1
      %p138 = scmp.eq.s32.totalorder %s23, 3
      %p139 = scmp.ne.s32.totalorder %s134, %s136
      %p140 = scmp.eq.s32.totalorder %s23, 0
      %p141 = por %p139, %p140
      %p142 = scmp.ne.s32.totalorder %s134, %s136
      %p143 = scmp.eq.s32.totalorder %s28, 3
      %p144 = por %p142, %p143
      %p145 = scmp.ne.s32.totalorder %s136, %s137
      %p146 = scmp.eq.s32.totalorder %s28, 0
      %p147 = por %p145, %p146
      %p148 = scmp.ne.s32.totalorder %s136, %s137
      %p149 = scmp.eq.s32.totalorder %s29, 3
      %p150 = por %p148, %p149
      %p152 = scmp.ne.s32.totalorder %s137, %s151
      %p153 = scmp.eq.s32.totalorder %s29, 0
      %p154 = por %p152, %p153
      %s155 = ssub.s32 %s31, %s45
      %p156 = scmp.eq.s32.totalorder %s155, 0
      %s158 = sadd.s32 %s157, 1
      %s159 = scalar_select %p156, %s157, %s158
      %p162 = pneg %p156
      %p163 = scmp.eq.s32.totalorder %s23, 3
      %p164 = por %p162, %p163
      %p165 = scmp.ne.s32.totalorder %s157, %s160
      %p166 = scmp.eq.s32.totalorder %s23, 0
      %p167 = por %p165, %p166
      %p168 = scmp.ne.s32.totalorder %s157, %s160
      %p169 = scmp.eq.s32.totalorder %s28, 3
      %p170 = por %p168, %p169
      %p171 = scmp.ne.s32.totalorder %s160, %s161
      %p172 = scmp.eq.s32.totalorder %s28, 0
      %p173 = por %p171, %p172
      %p174 = scmp.ne.s32.totalorder %s160, %s161
      %p175 = scmp.eq.s32.totalorder %s29, 3
      %p176 = por %p174, %p175
      %p178 = scmp.ne.s32.totalorder %s161, %s177
      %p179 = scmp.eq.s32.totalorder %s29, 0
      %p180 = por %p178, %p179
      %s181 = ssub.s32 %s31, %s45
      %p182 = scmp.eq.s32.totalorder %s181, 0
      %s184 = sadd.s32 %s183, 1
      %s185 = scalar_select %p182, %s183, %s184
      %p188 = pneg %p182
      %p189 = scmp.eq.s32.totalorder %s23, 3
      %p190 = por %p188, %p189
      %p191 = scmp.ne.s32.totalorder %s183, %s186
      %p192 = scmp.eq.s32.totalorder %s23, 0
      %p193 = por %p191, %p192
      %p194 = scmp.ne.s32.totalorder %s183, %s186
      %p195 = scmp.eq.s32.totalorder %s28, 3
      %p196 = por %p194, %p195
      %p197 = scmp.ne.s32.totalorder %s186, %s187
      %p198 = scmp.eq.s32.totalorder %s28, 0
      %p199 = por %p197, %p198
      %p200 = scmp.ne.s32.totalorder %s186, %s187
      %p201 = scmp.eq.s32.totalorder %s29, 3
      %p202 = por %p200, %p201
      %p204 = scmp.ne.s32.totalorder %s187, %s203
      %p205 = scmp.eq.s32.totalorder %s29, 0
      %p206 = por %p204, %p205
      %s207 = ssub.s32 %s31, %s45
      %p208 = scmp.eq.s32.totalorder %s207, 0
      %s210 = sadd.s32 %s209, 1
      %s211 = scalar_select %p208, %s209, %s210
      %p214 = pneg %p208
      %p215 = scmp.eq.s32.totalorder %s23, 3
      %p216 = por %p214, %p215
      %p217 = scmp.ne.s32.totalorder %s209, %s212
      %p218 = scmp.eq.s32.totalorder %s23, 0
      %p219 = por %p217, %p218
      %p220 = scmp.ne.s32.totalorder %s209, %s212
      %p221 = scmp.eq.s32.totalorder %s28, 3
      %p222 = por %p220, %p221
      %p223 = scmp.ne.s32.totalorder %s212, %s213
      %p224 = scmp.eq.s32.totalorder %s28, 0
      %p225 = por %p223, %p224
      %p226 = scmp.ne.s32.totalorder %s212, %s213
      %p227 = scmp.eq.s32.totalorder %s29, 3
      %p228 = por %p226, %p227
      %p230 = scmp.ne.s32.totalorder %s213, %s229
      %p231 = scmp.eq.s32.totalorder %s29, 0
      %p232 = por %p230, %p231
      %s233 = ssub.s32 %s31, %s45
      %p234 = scmp.eq.s32.totalorder %s233, 0
      %s236 = sadd.s32 %s235, 1
      %s237 = scalar_select %p234, %s235, %s236
      %p240 = pneg %p234
      %p241 = scmp.eq.s32.totalorder %s23, 3
      %p242 = por %p240, %p241
      %p243 = scmp.ne.s32.totalorder %s235, %s238
      %p244 = scmp.eq.s32.totalorder %s23, 0
      %p245 = por %p243, %p244
      %p246 = scmp.ne.s32.totalorder %s235, %s238
      %p247 = scmp.eq.s32.totalorder %s28, 3
      %p248 = por %p246, %p247
      %p249 = scmp.ne.s32.totalorder %s238, %s239
      %p250 = scmp.eq.s32.totalorder %s28, 0
      %p251 = por %p249, %p250
      %p252 = scmp.ne.s32.totalorder %s238, %s239
      %p253 = scmp.eq.s32.totalorder %s29, 3
      %p254 = por %p252, %p253
      %p256 = scmp.ne.s32.totalorder %s239, %s255
      %p257 = scmp.eq.s32.totalorder %s29, 0
      %p258 = por %p256, %p257
      %s259 = ssub.s32 %s30, %s49
      %s260 = ssub.s32 %s31, %s45
      %s261 = sor.u32 %s259, %s260
      %p262 = scmp.eq.s32.totalorder %s261, 0
      %s264 = sadd.s32 %s263, 1
      %s265 = scalar_select %p262, %s263, %s264
      %p268 = pneg %p262
      %p269 = scmp.eq.s32.totalorder %s23, 3
      %p270 = por %p268, %p269
      %p271 = scmp.ne.s32.totalorder %s263, %s266
      %p272 = scmp.eq.s32.totalorder %s23, 0
      %p273 = por %p271, %p272
      %p274 = scmp.ne.s32.totalorder %s263, %s266
      %p275 = scmp.eq.s32.totalorder %s28, 3
      %p276 = por %p274, %p275
      %p277 = scmp.ne.s32.totalorder %s266, %s267
      %p278 = scmp.eq.s32.totalorder %s28, 0
      %p279 = por %p277, %p278
      %p280 = scmp.ne.s32.totalorder %s266, %s267
      %p281 = scmp.eq.s32.totalorder %s29, 3
      %p282 = por %p280, %p281
      %p284 = scmp.ne.s32.totalorder %s267, %s283
      %p285 = scmp.eq.s32.totalorder %s29, 0
      %p286 = por %p284, %p285
      %p287 = scmp.le.s32.totalorder 1, %s23
      %p288 = scmp.lt.s32.totalorder %s23, 5
      %p289 = pnand %p287, %p288
      %p290 = pneg %p289
      // Predicated region
      $region9: #{tpu_custom_call.1} parent=5 // pred_check
        _
      $region10: #{tpu_custom_call.1} parent=5 // pred_check_branch
        %292 = sbr.rel (%p289) target = $region12
      $region11: #{tpu_custom_call.1} parent=5 // pred_region
        %s293 = ssub.s32 %s23, 1
        // Predicated region
        $region13: #{tpu_custom_call.1} parent=11 // pred_check
          %p294 = pneg %p147
        $region14: #{tpu_custom_call.1} parent=11 // pred_check_branch
          %296 = sbr.rel (%p294) target = $region16
        $region15: #{tpu_custom_call.1} parent=11 // pred_region
          _
        $region16: #{tpu_custom_call.1} parent=11 // pred_fallthru
          _
      $region12: #{tpu_custom_call.1} parent=5 // pred_fallthru
        _
      %p297 = scmp.lt.s32.totalorder %s23, 4
      // Predicated region
      $region17: #{tpu_custom_call.1} parent=5 // pred_check
        %p298 = pneg %p297
      $region18: #{tpu_custom_call.1} parent=5 // pred_check_branch
        %300 = sbr.rel (%p298) target = $region20
      $region19: #{tpu_custom_call.1} parent=5 // pred_region
        // Predicated region
        $region21: #{tpu_custom_call.1} parent=19 // pred_check
          %p301 = pneg %p64
        $region22: #{tpu_custom_call.1} parent=19 // pred_check_branch
          %303 = sbr.rel (%p301) target = $region24
        $region23: #{tpu_custom_call.1} parent=19 // pred_region
          %s304 = sand.u32 %s54, 1
          %s305 = scalar_lea.sflag [#allocation3], %s304
          %s306 = sand.u32 %s54, 1
          %s307 = smul.addr %s306, 8
          %s308 = scalar_lea.vmem [#allocation2], %s307
          %s310 = ssub.s32 128, 128
          %311 = vsyncadd %s305, %s310
          %s312 = smul.addr %s30, 2
          %s313 = sadd.s32 %s32, %s312
          %s314 = smul.addr %s313, 128
          %s315 = scalar_lea.hbm %s0, %s314
          %s317 = sshll.u32 %s308, 4
          %s318 = int_to_ptr.vmem [resolvable:$true] %s317
          %320 = dma.hbm_to_vmem [thread:$0]  %s315, 128, %s318, %s305
        $region24: #{tpu_custom_call.1} parent=19 // pred_fallthru
          _
        // Predicated region
        $region25: #{tpu_custom_call.1} parent=19 // pred_check
          %p321 = pneg %p92
        $region26: #{tpu_custom_call.1} parent=19 // pred_check_branch
          %323 = sbr.rel (%p321) target = $region28
        $region27: #{tpu_custom_call.1} parent=19 // pred_region
          %s324 = sand.u32 %s82, 1
          %s325 = sand.u32 %s82, 1
          %s326 = smul.addr %s325, 64
          %s327 = scalar_lea.vmem [#allocation5], %s326
          %s328 = smul.u32 16, %s32
          %s329 = smul.addr %s328, 2
          %s330 = sadd.s32 %s31, %s329
          %s331 = smul.addr %s330, 4
          %s332 = scalar_lea.vmem %s1, %s331
          // Predicated region
          $region29: #{tpu_custom_call.1} parent=27 // pred_check
            _
          $region30: #{tpu_custom_call.1} parent=27 // pred_check_branch
            %334 = sbr.rel (0) target = $region32
          $region31: #{tpu_custom_call.1} parent=27 // pred_region
            // Predicated region
            $region33: #{tpu_custom_call.1} parent=31 // pred_check
              _
            $region34: #{tpu_custom_call.1} parent=31 // pred_check_branch
              %336 = sbr.rel target = $region36
            $region35: #{tpu_custom_call.1} parent=31 // pred_region
              // Predicated region
              $region48: #{tpu_custom_call.1} parent=35 // pred_check
                _
              $region49: #{tpu_custom_call.1} parent=35 // pred_check_branch
                %381 = sbr.rel (0) target = $region51
              $region50: #{tpu_custom_call.1} parent=35 // pred_region
                loop: start=0, step=1, limit=1
                $region52: #{tpu_custom_call.1} parent=50 // loop_pre_header
                  _
                $region53: #{tpu_custom_call.1} parent=50 // loop_header
                  %s383 = sphi 0, %s387
                  %p384 = scmp.ge.s32.totalorder %s383, 1
                  %s388 = sphi %s332, %s332
                  %s389 = sphi %s327, %s327
                $region54: #{tpu_custom_call.1} parent=50 // loop_header_branch
                  %386 = sbr.rel (%p384) target = $region58
                $region55: #{tpu_custom_call.1} parent=50 // loop_body
                  _
                $region56: #{tpu_custom_call.1} parent=50 // loop_footer
                  %s387 = sadd.s32 1, %s383
                $region57: #{tpu_custom_call.1} parent=50 // loop_footer_branch
                  %382 = sbr.rel target = $region53
                $region58: #{tpu_custom_call.1} parent=50 // loop_exit
                  _
                loop: start=0, step=1, limit=1
                $region59: #{tpu_custom_call.1} parent=50 // loop_pre_header
                  _
                $region60: #{tpu_custom_call.1} parent=50 // loop_header
                  %s392 = sphi 0, %s396
                  %p393 = scmp.ge.s32.totalorder %s392, 1
                  %s397 = sphi %s332, %s332
                  %s398 = sphi %s327, %s327
                $region61: #{tpu_custom_call.1} parent=50 // loop_header_branch
                  %395 = sbr.rel (%p393) target = $region65
                $region62: #{tpu_custom_call.1} parent=50 // loop_body
                  %v399 = vld [vmem:[%s397] sm:$0xf]
                  %400 = vst [vmem:[%s398] sm:$0xf] %v399
                  %v401 = vld [vmem:[%s397 + $0x8] sm:$0xf]
                  %402 = vst [vmem:[%s398 + $0x4] sm:$0xf] %v401
                  %v403 = vld [vmem:[%s397 + $0x10] sm:$0xf]
                  %404 = vst [vmem:[%s398 + $0x8] sm:$0xf] %v403
                  %v405 = vld [vmem:[%s397 + $0x18] sm:$0xf]
                  %406 = vst [vmem:[%s398 + $0xc] sm:$0xf] %v405
                  %v407 = vld [vmem:[%s397 + $0x20] sm:$0xf]
                  %408 = vst [vmem:[%s398 + $0x10] sm:$0xf] %v407
                  %v409 = vld [vmem:[%s397 + $0x28] sm:$0xf]
                  %410 = vst [vmem:[%s398 + $0x14] sm:$0xf] %v409
                  %v411 = vld [vmem:[%s397 + $0x30] sm:$0xf]
                  %412 = vst [vmem:[%s398 + $0x18] sm:$0xf] %v411
                  %v413 = vld [vmem:[%s397 + $0x38] sm:$0xf]
                  %414 = vst [vmem:[%s398 + $0x1c] sm:$0xf] %v413
                  %v415 = vld [vmem:[%s397 + $0x40] sm:$0xf]
                  %416 = vst [vmem:[%s398 + $0x20] sm:$0xf] %v415
                  %v417 = vld [vmem:[%s397 + $0x48] sm:$0xf]
                  %418 = vst [vmem:[%s398 + $0x24] sm:$0xf] %v417
                  %v419 = vld [vmem:[%s397 + $0x50] sm:$0xf]
                  %420 = vst [vmem:[%s398 + $0x28] sm:$0xf] %v419
                  %v421 = vld [vmem:[%s397 + $0x58] sm:$0xf]
                  %422 = vst [vmem:[%s398 + $0x2c] sm:$0xf] %v421
                  %v423 = vld [vmem:[%s397 + $0x60] sm:$0xf]
                  %424 = vst [vmem:[%s398 + $0x30] sm:$0xf] %v423
                  %v425 = vld [vmem:[%s397 + $0x68] sm:$0xf]
                  %426 = vst [vmem:[%s398 + $0x34] sm:$0xf] %v425
                  %v427 = vld [vmem:[%s397 + $0x70] sm:$0xf]
                  %428 = vst [vmem:[%s398 + $0x38] sm:$0xf] %v427
                  %v429 = vld [vmem:[%s397 + $0x78] sm:$0xf]
                  %430 = vst [vmem:[%s398 + $0x3c] sm:$0xf] %v429
                $region63: #{tpu_custom_call.1} parent=50 // loop_footer
                  %s396 = sadd.s32 1, %s392
                $region64: #{tpu_custom_call.1} parent=50 // loop_footer_branch
                  %391 = sbr.rel target = $region60
                $region65: #{tpu_custom_call.1} parent=50 // loop_exit
                  _
              $region51: #{tpu_custom_call.1} parent=35 // pred_fallthru
                _
            $region36: #{tpu_custom_call.1} parent=31 // pred_fallthru
              _
            // Predicated region
            $region37: #{tpu_custom_call.1} parent=31 // pred_check
              _
            $region38: #{tpu_custom_call.1} parent=31 // pred_check_branch
              %338 = sbr.rel (0) target = $region40
            $region39: #{tpu_custom_call.1} parent=31 // pred_region
              loop: start=0, step=1, limit=1
              $region41: #{tpu_custom_call.1} parent=39 // loop_pre_header
                _
              $region42: #{tpu_custom_call.1} parent=39 // loop_header
                %s341 = sphi 0, %s345
                %p342 = scmp.ge.s32.totalorder %s341, 1
                %s346 = sphi %s332, %s332
                %s347 = sphi %s327, %s327
              $region43: #{tpu_custom_call.1} parent=39 // loop_header_branch
                %344 = sbr.rel (%p342) target = $region47
              $region44: #{tpu_custom_call.1} parent=39 // loop_body
                %v348 = vld [vmem:[%s346] sm:$0xf]
                %349 = vst [vmem:[%s347] sm:$0xf] %v348
                %v350 = vld [vmem:[%s346 + $0x8] sm:$0xf]
                %351 = vst [vmem:[%s347 + $0x4] sm:$0xf] %v350
                %v352 = vld [vmem:[%s346 + $0x10] sm:$0xf]
                %353 = vst [vmem:[%s347 + $0x8] sm:$0xf] %v352
                %v354 = vld [vmem:[%s346 + $0x18] sm:$0xf]
                %355 = vst [vmem:[%s347 + $0xc] sm:$0xf] %v354
                %v356 = vld [vmem:[%s346 + $0x20] sm:$0xf]
                %357 = vst [vmem:[%s347 + $0x10] sm:$0xf] %v356
                %v358 = vld [vmem:[%s346 + $0x28] sm:$0xf]
                %359 = vst [vmem:[%s347 + $0x14] sm:$0xf] %v358
                %v360 = vld [vmem:[%s346 + $0x30] sm:$0xf]
                %361 = vst [vmem:[%s347 + $0x18] sm:$0xf] %v360
                %v362 = vld [vmem:[%s346 + $0x38] sm:$0xf]
                %363 = vst [vmem:[%s347 + $0x1c] sm:$0xf] %v362
                %v364 = vld [vmem:[%s346 + $0x40] sm:$0xf]
                %365 = vst [vmem:[%s347 + $0x20] sm:$0xf] %v364
                %v366 = vld [vmem:[%s346 + $0x48] sm:$0xf]
                %367 = vst [vmem:[%s347 + $0x24] sm:$0xf] %v366
                %v368 = vld [vmem:[%s346 + $0x50] sm:$0xf]
                %369 = vst [vmem:[%s347 + $0x28] sm:$0xf] %v368
                %v370 = vld [vmem:[%s346 + $0x58] sm:$0xf]
                %371 = vst [vmem:[%s347 + $0x2c] sm:$0xf] %v370
                %v372 = vld [vmem:[%s346 + $0x60] sm:$0xf]
                %373 = vst [vmem:[%s347 + $0x30] sm:$0xf] %v372
                %v374 = vld [vmem:[%s346 + $0x68] sm:$0xf]
                %375 = vst [vmem:[%s347 + $0x34] sm:$0xf] %v374
                %v376 = vld [vmem:[%s346 + $0x70] sm:$0xf]
                %377 = vst [vmem:[%s347 + $0x38] sm:$0xf] %v376
                %v378 = vld [vmem:[%s346 + $0x78] sm:$0xf]
                %379 = vst [vmem:[%s347 + $0x3c] sm:$0xf] %v378
              $region45: #{tpu_custom_call.1} parent=39 // loop_footer
                %s345 = sadd.s32 1, %s341
              $region46: #{tpu_custom_call.1} parent=39 // loop_footer_branch
                %340 = sbr.rel target = $region42
              $region47: #{tpu_custom_call.1} parent=39 // loop_exit
                _
            $region40: #{tpu_custom_call.1} parent=31 // pred_fallthru
              _
          $region32: #{tpu_custom_call.1} parent=27 // pred_fallthru
            _
          %431 = vnop
        $region28: #{tpu_custom_call.1} parent=19 // pred_fallthru
          _
        // Predicated region
        $region66: #{tpu_custom_call.1} parent=19 // pred_check
          %p432 = pneg %p120
        $region67: #{tpu_custom_call.1} parent=19 // pred_check_branch
          %434 = sbr.rel (%p432) target = $region69
        $region68: #{tpu_custom_call.1} parent=19 // pred_region
          %s435 = sand.u32 %s110, 1
          %s436 = scalar_lea.sflag [#allocation7], %s435
          %s437 = sand.u32 %s110, 1
          %s438 = smul.addr %s437, 64
          %s439 = scalar_lea.vmem [#allocation6], %s438
          %s440 = smul.u32 16, %s32
          %s442 = ssub.s32 1024, 1024
          %443 = vsyncadd %s436, %s442
          %s444 = smul.addr %s440, 2
          %s445 = sadd.s32 %s31, %s444
          %s446 = smul.addr %s445, 64
          %s447 = scalar_lea.hbm %s2, %s446
          %s448 = sshll.u32 %s439, 4
          %s449 = int_to_ptr.vmem [resolvable:$true] %s448
          %454 = dma.hbm_to_vmem [thread:$0]  %s447, 1024, %s449, %s436, 128, 64, 4
        $region69: #{tpu_custom_call.1} parent=19 // pred_fallthru
          _
        // Predicated region
        $region70: #{tpu_custom_call.1} parent=19 // pred_check
          %p455 = pneg %p167
        $region71: #{tpu_custom_call.1} parent=19 // pred_check_branch
          %457 = sbr.rel (%p455) target = $region73
        $region72: #{tpu_custom_call.1} parent=19 // pred_region
          %p458 = scmp.lt.s32.totalorder %s31, 1
          %s459 = scalar_select %p458, %s31, 1
          %s460 = scalar_lea.vmem %s4, %s459
        $region73: #{tpu_custom_call.1} parent=19 // pred_fallthru
          _
        // Predicated region
        $region74: #{tpu_custom_call.1} parent=19 // pred_check
          %p461 = pneg %p193
        $region75: #{tpu_custom_call.1} parent=19 // pred_check_branch
          %463 = sbr.rel (%p461) target = $region77
        $region76: #{tpu_custom_call.1} parent=19 // pred_region
          %p464 = scmp.lt.s32.totalorder %s31, 1
          %s465 = scalar_select %p464, %s31, 1
          %s466 = scalar_lea.vmem %s5, %s465
        $region77: #{tpu_custom_call.1} parent=19 // pred_fallthru
          _
        // Predicated region
        $region78: #{tpu_custom_call.1} parent=19 // pred_check
          %p467 = pneg %p219
        $region79: #{tpu_custom_call.1} parent=19 // pred_check_branch
          %469 = sbr.rel (%p467) target = $region81
        $region80: #{tpu_custom_call.1} parent=19 // pred_region
          %p470 = scmp.lt.s32.totalorder %s31, 1
          %s471 = scalar_select %p470, %s31, 1
          %s472 = scalar_lea.vmem %s6, %s471
        $region81: #{tpu_custom_call.1} parent=19 // pred_fallthru
          _
        // Predicated region
        $region82: #{tpu_custom_call.1} parent=19 // pred_check
          %p473 = pneg %p245
        $region83: #{tpu_custom_call.1} parent=19 // pred_check_branch
          %475 = sbr.rel (%p473) target = $region85
        $region84: #{tpu_custom_call.1} parent=19 // pred_region
          %p476 = scmp.lt.s32.totalorder %s31, 1
          %s477 = scalar_select %p476, %s31, 1
          %s478 = scalar_lea.vmem %s7, %s477
        $region85: #{tpu_custom_call.1} parent=19 // pred_fallthru
          _
      $region20: #{tpu_custom_call.1} parent=5 // pred_fallthru
        _
      %p479 = scmp.le.s32.totalorder 1, %s23
      %p480 = scmp.lt.s32.totalorder %s23, 5
      %p481 = pnand %p479, %p480
      %p482 = pneg %p481
      // Predicated region
      $region86: #{tpu_custom_call.1} parent=5 // pred_check
        _
      $region87: #{tpu_custom_call.1} parent=5 // pred_check_branch
        %484 = sbr.rel (%p481) target = $region89
      $region88: #{tpu_custom_call.1} parent=5 // pred_region
        %s485 = ssub.s32 %s23, 1
        %s486 = sand.u32 %s57, 1
        %s487 = scalar_lea.sflag [#allocation3], %s486
        %s488 = sand.u32 %s57, 1
        %s489 = smul.addr %s488, 8
        %s490 = scalar_lea.vmem [#allocation2], %s489
        // Predicated region
        $region90: #{tpu_custom_call.1} parent=88 // pred_check
          %p491 = pneg %p70
        $region91: #{tpu_custom_call.1} parent=88 // pred_check_branch
          %493 = sbr.rel (%p491) target = $region93
        $region92: #{tpu_custom_call.1} parent=88 // pred_region
          %494 = dma.done %s487, 128
        $region93: #{tpu_custom_call.1} parent=88 // pred_fallthru
          _
        %s495 = sand.u32 %s85, 1
        %s496 = sand.u32 %s85, 1
        %s497 = smul.addr %s496, 64
        %s498 = scalar_lea.vmem [#allocation5], %s497
        // Predicated region
        $region94: #{tpu_custom_call.1} parent=88 // pred_check
          %p499 = pneg %p98
        $region95: #{tpu_custom_call.1} parent=88 // pred_check_branch
          %501 = sbr.rel (%p499) target = $region97
        $region96: #{tpu_custom_call.1} parent=88 // pred_region
          _
        $region97: #{tpu_custom_call.1} parent=88 // pred_fallthru
          _
        %s502 = sand.u32 %s113, 1
        %s503 = scalar_lea.sflag [#allocation7], %s502
        %s504 = sand.u32 %s113, 1
        %s505 = smul.addr %s504, 64
        %s506 = scalar_lea.vmem [#allocation6], %s505
        // Predicated region
        $region98: #{tpu_custom_call.1} parent=88 // pred_check
          %p507 = pneg %p126
        $region99: #{tpu_custom_call.1} parent=88 // pred_check_branch
          %509 = sbr.rel (%p507) target = $region101
        $region100: #{tpu_custom_call.1} parent=88 // pred_region
          %510 = dma.done %s503, 1024
        $region101: #{tpu_custom_call.1} parent=88 // pred_fallthru
          _
        %s511 = sand.u32 %s57, 1
        %s512 = scalar_lea.sflag [#allocation3], %s511
        %s513 = sand.u32 %s57, 1
        %s514 = smul.addr %s513, 8
        %s515 = scalar_lea.vmem [#allocation2], %s514
        %p516 = pneg %p70
        %p517 = pneg %p67
        %s518 = sand.u32 %s85, 1
        %s519 = sand.u32 %s85, 1
        %s520 = smul.addr %s519, 64
        %s521 = scalar_lea.vmem [#allocation5], %s520
        %p522 = pneg %p98
        %p523 = pneg %p95
        %s524 = sand.u32 %s113, 1
        %s525 = scalar_lea.sflag [#allocation7], %s524
        %s526 = sand.u32 %s113, 1
        %s527 = smul.addr %s526, 64
        %s528 = scalar_lea.vmem [#allocation6], %s527
        %p529 = pneg %p126
        %p530 = pneg %p123
        %p531 = pneg %p147
        %p532 = pneg %p144
        %p533 = scmp.lt.s32.totalorder %s34, 1
        %s534 = scalar_select %p533, %s34, 1
        %s535 = scalar_lea.vmem %s4, %s534
        %p536 = pneg %p173
        %p537 = pneg %p170
        %p538 = scmp.lt.s32.totalorder %s34, 1
        %s539 = scalar_select %p538, %s34, 1
        %s540 = scalar_lea.vmem %s5, %s539
        %p541 = pneg %p199
        %p542 = pneg %p196
        %p543 = scmp.lt.s32.totalorder %s34, 1
        %s544 = scalar_select %p543, %s34, 1
        %s545 = scalar_lea.vmem %s6, %s544
        %p546 = pneg %p225
        %p547 = pneg %p222
        %p548 = scmp.lt.s32.totalorder %s34, 1
        %s549 = scalar_select %p548, %s34, 1
        %s550 = scalar_lea.vmem %s7, %s549
        %p551 = pneg %p251
        %p552 = pneg %p248
        %p553 = pneg %p279
        %p554 = pneg %p276
        %s555 = sand.u32 %s266, 1
        %s556 = scalar_lea.sflag [#allocation4], %s555
        %s557 = sand.u32 %s266, 1
        %s558 = smul.addr %s557, 8
        %s559 = scalar_lea.vmem [#allocation8], %s558
        %s560 = smul.u32 16, %s35
        %s561 = smul.u32 16, %s35
        %p562 = scmp.lt.s32.totalorder %s34, 1
        %s563 = scalar_select %p562, %s34, 1
        %s564 = scalar_lea.vmem %s4, %s563
        %p565 = scmp.lt.s32.totalorder %s34, 1
        %s566 = scalar_select %p565, %s34, 1
        %s567 = scalar_lea.vmem %s5, %s566
        %p568 = scmp.lt.s32.totalorder %s34, 1
        %s569 = scalar_select %p568, %s34, 1
        %s570 = scalar_lea.vmem %s6, %s569
        %p571 = scmp.lt.s32.totalorder %s34, 1
        %s572 = scalar_select %p571, %s34, 1
        %s573 = scalar_lea.vmem %s7, %s572
        %p574 = scmp.eq.s32.totalorder %s35, 0
        // Predicated region
        $region102: #{tpu_custom_call.1} parent=88 // pred_check
          %p575 = pneg %p574
        $region103: #{tpu_custom_call.1} parent=88 // pred_check_branch
          %577 = sbr.rel (%p575) target = $region105
        $region104: #{tpu_custom_call.1} parent=88 // pred_region
          %v578 = vld [vmem:[%s567] sm:$0x1]
          %v579 = vld [vmem:[%s570] sm:$0x1]
          %v580 = vld [vmem:[%s573] sm:$0x1]
          %v581 = vmul.f32 %v579, %v580
          %v582 = vadd.f32 %v578, %v581
          %v584 = vlaneseq
          %v585 = vshrl.u32 %v584, 7
          %v586 = vsub.s32 0, %v585
          %v587 = vrot.slane %v582, %v586
          %589 = vst [vmem:[%s559] sm:$0xff] %v587
        $region105: #{tpu_custom_call.1} parent=88 // pred_fallthru
          _
        %s590 = smul.u32 %s35, 128
        %s591 = scalar_lea.vmem %s3, %s590
        %v592 = vld [vmem:[%s591] sm:$0xff]
        %v593 = vld [vmem:[%s591 + $0x8] sm:$0xff]
        %v594 = vld [vmem:[%s591 + $0x10] sm:$0xff]
        %v595 = vld [vmem:[%s591 + $0x18] sm:$0xff]
        %v596 = vld [vmem:[%s591 + $0x20] sm:$0xff]
        %v597 = vld [vmem:[%s591 + $0x28] sm:$0xff]
        %v598 = vld [vmem:[%s591 + $0x30] sm:$0xff]
        %v599 = vld [vmem:[%s591 + $0x38] sm:$0xff]
        %v600 = vld [vmem:[%s591 + $0x40] sm:$0xff]
        %v601 = vld [vmem:[%s591 + $0x48] sm:$0xff]
        %v602 = vld [vmem:[%s591 + $0x50] sm:$0xff]
        %v603 = vld [vmem:[%s591 + $0x58] sm:$0xff]
        %v604 = vld [vmem:[%s591 + $0x60] sm:$0xff]
        %v605 = vld [vmem:[%s591 + $0x68] sm:$0xff]
        %v606 = vld [vmem:[%s591 + $0x70] sm:$0xff]
        %v607 = vld [vmem:[%s591 + $0x78] sm:$0xff]
        %v608 = vld [vmem:[%s564] sm:$0x1]
        %610 = vset.pattern.permute.xlu0 0
        %611 = vperm.xlu0 %610, %v592
        %v612 = vpop.permute.xlu0 %611
        %615 = vset.pattern.permute.xlu0 0
        %616 = vperm.xlu0 %615, %v593
        %v617 = vpop.permute.xlu0 %616
        %620 = vset.pattern.permute.xlu0 0
        %621 = vperm.xlu0 %620, %v594
        %v622 = vpop.permute.xlu0 %621
        %625 = vset.pattern.permute.xlu0 0
        %626 = vperm.xlu0 %625, %v595
        %v627 = vpop.permute.xlu0 %626
        %630 = vset.pattern.permute.xlu0 0
        %631 = vperm.xlu0 %630, %v596
        %v632 = vpop.permute.xlu0 %631
        %635 = vset.pattern.permute.xlu0 0
        %636 = vperm.xlu0 %635, %v597
        %v637 = vpop.permute.xlu0 %636
        %640 = vset.pattern.permute.xlu0 0
        %641 = vperm.xlu0 %640, %v598
        %v642 = vpop.permute.xlu0 %641
        %645 = vset.pattern.permute.xlu0 0
        %646 = vperm.xlu0 %645, %v599
        %v647 = vpop.permute.xlu0 %646
        %650 = vset.pattern.permute.xlu0 0
        %651 = vperm.xlu0 %650, %v600
        %v652 = vpop.permute.xlu0 %651
        %655 = vset.pattern.permute.xlu0 0
        %656 = vperm.xlu0 %655, %v601
        %v657 = vpop.permute.xlu0 %656
        %660 = vset.pattern.permute.xlu0 0
        %661 = vperm.xlu0 %660, %v602
        %v662 = vpop.permute.xlu0 %661
        %665 = vset.pattern.permute.xlu0 0
        %666 = vperm.xlu0 %665, %v603
        %v667 = vpop.permute.xlu0 %666
        %670 = vset.pattern.permute.xlu0 0
        %671 = vperm.xlu0 %670, %v604
        %v672 = vpop.permute.xlu0 %671
        %675 = vset.pattern.permute.xlu0 0
        %676 = vperm.xlu0 %675, %v605
        %v677 = vpop.permute.xlu0 %676
        %680 = vset.pattern.permute.xlu0 0
        %681 = vperm.xlu0 %680, %v606
        %v682 = vpop.permute.xlu0 %681
        %685 = vset.pattern.permute.xlu0 0
        %686 = vperm.xlu0 %685, %v607
        %v687 = vpop.permute.xlu0 %686
        %v690 = vlaneseq
        %v691 = vshrl.u32 %v690, 7
        %v692 = vsub.s32 0, %v691
        %v693 = vrot.slane %v608, %v692
        %v695 = vmul.f32 %v612, %v693
        %v696 = vmul.f32 %v617, %v693
        %v697 = vmul.f32 %v622, %v693
        %v698 = vmul.f32 %v627, %v693
        %v699 = vmul.f32 %v632, %v693
        %v700 = vmul.f32 %v637, %v693
        %v701 = vmul.f32 %v642, %v693
        %v702 = vmul.f32 %v647, %v693
        %v703 = vmul.f32 %v652, %v693
        %v704 = vmul.f32 %v657, %v693
        %v705 = vmul.f32 %v662, %v693
        %v706 = vmul.f32 %v667, %v693
        %v707 = vmul.f32 %v672, %v693
        %v708 = vmul.f32 %v677, %v693
        %v709 = vmul.f32 %v682, %v693
        %v710 = vmul.f32 %v687, %v693
        %v711 = vld [vmem:[%s498] sm:$0xf]
        %v712 = vld [vmem:[%s498 + $0x4] sm:$0xf]
        %v713 = vld [vmem:[%s498 + $0x8] sm:$0xf]
        %v714 = vld [vmem:[%s498 + $0xc] sm:$0xf]
        %v715 = vld [vmem:[%s498 + $0x10] sm:$0xf]
        %v716 = vld [vmem:[%s498 + $0x14] sm:$0xf]
        %v717 = vld [vmem:[%s498 + $0x18] sm:$0xf]
        %v718 = vld [vmem:[%s498 + $0x1c] sm:$0xf]
        %v719 = vld [vmem:[%s498 + $0x20] sm:$0xf]
        %v720 = vld [vmem:[%s498 + $0x24] sm:$0xf]
        %v721 = vld [vmem:[%s498 + $0x28] sm:$0xf]
        %v722 = vld [vmem:[%s498 + $0x2c] sm:$0xf]
        %v723 = vld [vmem:[%s498 + $0x30] sm:$0xf]
        %v724 = vld [vmem:[%s498 + $0x34] sm:$0xf]
        %v725 = vld [vmem:[%s498 + $0x38] sm:$0xf]
        %v726 = vld [vmem:[%s498 + $0x3c] sm:$0xf]
        %v727 = vunpack.c.l.bf16 %v711
        %v728 = vunpack.c.l.bf16 %v712
        %v729 = vunpack.c.l.bf16 %v713
        %v730 = vunpack.c.l.bf16 %v714
        %v731 = vunpack.c.l.bf16 %v715
        %v732 = vunpack.c.l.bf16 %v716
        %v733 = vunpack.c.l.bf16 %v717
        %v734 = vunpack.c.l.bf16 %v718
        %v735 = vunpack.c.l.bf16 %v719
        %v736 = vunpack.c.l.bf16 %v720
        %v737 = vunpack.c.l.bf16 %v721
        %v738 = vunpack.c.l.bf16 %v722
        %v739 = vunpack.c.l.bf16 %v723
        %v740 = vunpack.c.l.bf16 %v724
        %v741 = vunpack.c.l.bf16 %v725
        %v742 = vunpack.c.l.bf16 %v726
        %v743 = vld [vmem:[%s506] sm:$0xf]
        %v744 = vld [vmem:[%s506 + $0x4] sm:$0xf]
        %v745 = vld [vmem:[%s506 + $0x8] sm:$0xf]
        %v746 = vld [vmem:[%s506 + $0xc] sm:$0xf]
        %v747 = vld [vmem:[%s506 + $0x10] sm:$0xf]
        %v748 = vld [vmem:[%s506 + $0x14] sm:$0xf]
        %v749 = vld [vmem:[%s506 + $0x18] sm:$0xf]
        %v750 = vld [vmem:[%s506 + $0x1c] sm:$0xf]
        %v751 = vld [vmem:[%s506 + $0x20] sm:$0xf]
        %v752 = vld [vmem:[%s506 + $0x24] sm:$0xf]
        %v753 = vld [vmem:[%s506 + $0x28] sm:$0xf]
        %v754 = vld [vmem:[%s506 + $0x2c] sm:$0xf]
        %v755 = vld [vmem:[%s506 + $0x30] sm:$0xf]
        %v756 = vld [vmem:[%s506 + $0x34] sm:$0xf]
        %v757 = vld [vmem:[%s506 + $0x38] sm:$0xf]
        %v758 = vld [vmem:[%s506 + $0x3c] sm:$0xf]
        %v759 = vunpack.c.l.bf16 %v743
        %v760 = vunpack.c.l.bf16 %v744
        %v761 = vunpack.c.l.bf16 %v745
        %v762 = vunpack.c.l.bf16 %v746
        %v763 = vunpack.c.l.bf16 %v747
        %v764 = vunpack.c.l.bf16 %v748
        %v765 = vunpack.c.l.bf16 %v749
        %v766 = vunpack.c.l.bf16 %v750
        %v767 = vunpack.c.l.bf16 %v751
        %v768 = vunpack.c.l.bf16 %v752
        %v769 = vunpack.c.l.bf16 %v753
        %v770 = vunpack.c.l.bf16 %v754
        %v771 = vunpack.c.l.bf16 %v755
        %v772 = vunpack.c.l.bf16 %v756
        %v773 = vunpack.c.l.bf16 %v757
        %v774 = vunpack.c.l.bf16 %v758
        %v775 = vmul.f32 %v759, %v695
        %v776 = vmul.f32 %v760, %v696
        %v777 = vmul.f32 %v761, %v697
        %v778 = vmul.f32 %v762, %v698
        %v779 = vmul.f32 %v763, %v699
        %v780 = vmul.f32 %v764, %v700
        %v781 = vmul.f32 %v765, %v701
        %v782 = vmul.f32 %v766, %v702
        %v783 = vmul.f32 %v767, %v703
        %v784 = vmul.f32 %v768, %v704
        %v785 = vmul.f32 %v769, %v705
        %v786 = vmul.f32 %v770, %v706
        %v787 = vmul.f32 %v771, %v707
        %v788 = vmul.f32 %v772, %v708
        %v789 = vmul.f32 %v773, %v709
        %v790 = vmul.f32 %v774, %v710
        %v791 = vadd.f32 %v727, %v775
        %v792 = vadd.f32 %v728, %v776
        %v793 = vadd.f32 %v729, %v777
        %v794 = vadd.f32 %v730, %v778
        %v795 = vadd.f32 %v731, %v779
        %v796 = vadd.f32 %v732, %v780
        %v797 = vadd.f32 %v733, %v781
        %v798 = vadd.f32 %v734, %v782
        %v799 = vadd.f32 %v735, %v783
        %v800 = vadd.f32 %v736, %v784
        %v801 = vadd.f32 %v737, %v785
        %v802 = vadd.f32 %v738, %v786
        %v803 = vadd.f32 %v739, %v787
        %v804 = vadd.f32 %v740, %v788
        %v805 = vadd.f32 %v741, %v789
        %v806 = vadd.f32 %v742, %v790
        %v807 = vld [vmem:[%s559] sm:$0xff]
        %v808 = vld [vmem:[%s490] sm:$0xff]
        %809 = vmatprep.subr.mxu0 0.0
        %810 = vmatpush1.msra.mxu0 %v791
        %811 = vmatprep.subr.mxu0 0.0
        %812 = vmatpush1.msra.mxu0 %v792
        %813 = vmatprep.subr.mxu0 0.0
        %814 = vmatpush1.msra.mxu0 %v793
        %815 = vmatprep.subr.mxu0 0.0
        %816 = vmatpush1.msra.mxu0 %v794
        %817 = vmatprep.subr.mxu0 0.0
        %818 = vmatpush1.msra.mxu0 %v795
        %819 = vmatprep.subr.mxu0 0.0
        %820 = vmatpush1.msra.mxu0 %v796
        %821 = vmatprep.subr.mxu0 0.0
        %822 = vmatpush1.msra.mxu0 %v797
        %823 = vmatprep.subr.mxu0 0.0
        %824 = vmatpush1.msra.mxu0 %v798
        %825 = vmatprep.subr.mxu0 0.0
        %826 = vmatpush1.msra.mxu0 %v799
        %827 = vmatprep.subr.mxu0 0.0
        %828 = vmatpush1.msra.mxu0 %v800
        %829 = vmatprep.subr.mxu0 0.0
        %830 = vmatpush1.msra.mxu0 %v801
        %831 = vmatprep.subr.mxu0 0.0
        %832 = vmatpush1.msra.mxu0 %v802
        %833 = vmatprep.subr.mxu0 0.0
        %834 = vmatpush1.msra.mxu0 %v803
        %835 = vmatprep.subr.mxu0 0.0
        %836 = vmatpush1.msra.mxu0 %v804
        %837 = vmatprep.subr.mxu0 0.0
        %838 = vmatpush1.msra.mxu0 %v805
        %839 = vmatprep.subr.mxu0 0.0
        %840 = vmatpush1.msra.mxu0 %v806
        %841 = vmatprep.subr.mxu0 0.0
        %842 = vmatpush1.msra.mxu0 0.0
        %843 = vmatprep.subr.mxu0 0.0
        %844 = vmatpush1.msra.mxu0 0.0
        %845 = vmatprep.subr.mxu0 0.0
        %846 = vmatpush1.msra.mxu0 0.0
        %847 = vmatprep.subr.mxu0 0.0
        %848 = vmatpush1.msra.mxu0 0.0
        %849 = vmatprep.subr.mxu0 0.0
        %850 = vmatpush1.msra.mxu0 0.0
        %851 = vmatprep.subr.mxu0 0.0
        %852 = vmatpush1.msra.mxu0 0.0
        %853 = vmatprep.subr.mxu0 0.0
        %854 = vmatpush1.msra.mxu0 0.0
        %855 = vmatprep.subr.mxu0 0.0
        %856 = vmatpush1.msra.mxu0 0.0
        %857 = vmatprep.subr.mxu0 0.0
        %858 = vmatpush1.msra.mxu0 0.0
        %859 = vmatprep.subr.mxu0 0.0
        %860 = vmatpush1.msra.mxu0 0.0
        %861 = vmatprep.subr.mxu0 0.0
        %862 = vmatpush1.msra.mxu0 0.0
        %863 = vmatprep.subr.mxu0 0.0
        %864 = vmatpush1.msra.mxu0 0.0
        %865 = vmatprep.subr.mxu0 0.0
        %866 = vmatpush1.msra.mxu0 0.0
        %867 = vmatprep.subr.mxu0 0.0
        %868 = vmatpush1.msra.mxu0 0.0
        %869 = vmatprep.subr.mxu0 0.0
        %870 = vmatpush1.msra.mxu0 0.0
        %871 = vmatprep.subr.mxu0 0.0
        %872 = vmatpush1.msra.mxu0 0.0
        %873 = vmatprep.mubr.f32.mxu0 0.0
        %874 = vmatmul.mubr.f32.gmra.mrb[0].mxu0 %v808
        %v875 = vpop.f32.mrb[0].mxu0
        %v876 = vadd.f32 0.0, %v875
        %v877 = vpop.f32.mrb[0].mxu0
        %878 = vdwg.mxu0
        %v879 = vadd.f32 %v807, %v876
        %880 = vst [vmem:[%s559] sm:$0xff] %v879
        %s881 = sand.u32 %s266, 1
        %s882 = scalar_lea.sflag [#allocation4], %s881
        %s883 = sand.u32 %s266, 1
        %s884 = smul.addr %s883, 8
        %s885 = scalar_lea.vmem [#allocation8], %s884
        // Predicated region
        $region106: #{tpu_custom_call.1} parent=88 // pred_check
          %p886 = pneg %p276
        $region107: #{tpu_custom_call.1} parent=88 // pred_check_branch
          %888 = sbr.rel (%p886) target = $region109
        $region108: #{tpu_custom_call.1} parent=88 // pred_region
          %s890 = ssub.s32 128, 128
          %891 = vsyncadd %s882, %s890
          %s892 = smul.addr %s33, 2
          %s893 = sadd.s32 %s34, %s892
          %s894 = smul.addr %s893, 128
          %s895 = scalar_lea.hbm %s8, %s894
          %s897 = sshll.u32 %s885, 4
          %s898 = int_to_ptr.vmem [resolvable:$true] %s897
          %900 = dma.vmem_to_hbm [thread:$0]  %s898, 128, %s895, %s882
        $region109: #{tpu_custom_call.1} parent=88 // pred_fallthru
          _
      $region89: #{tpu_custom_call.1} parent=5 // pred_fallthru
        _
      %p901 = scmp.le.s32.totalorder 2, %s23
      // Predicated region
      $region110: #{tpu_custom_call.1} parent=5 // pred_check
        %p902 = pneg %p901
      $region111: #{tpu_custom_call.1} parent=5 // pred_check_branch
        %904 = sbr.rel (%p902) target = $region113
      $region112: #{tpu_custom_call.1} parent=5 // pred_region
        %s905 = ssub.s32 %s23, 2
        // Predicated region
        $region114: #{tpu_custom_call.1} parent=112 // pred_check
          %p906 = pneg %p282
        $region115: #{tpu_custom_call.1} parent=112 // pred_check_branch
          %908 = sbr.rel (%p906) target = $region117
        $region116: #{tpu_custom_call.1} parent=112 // pred_region
          %s909 = sand.u32 %s267, 1
          %s910 = scalar_lea.sflag [#allocation4], %s909
          %s911 = sand.u32 %s267, 1
          %s912 = smul.addr %s911, 8
          %s913 = scalar_lea.vmem [#allocation8], %s912
          %914 = dma.done %s910, 128
        $region117: #{tpu_custom_call.1} parent=112 // pred_fallthru
          _
      $region113: #{tpu_custom_call.1} parent=5 // pred_fallthru
        _
    $region6: #{tpu_custom_call.1} parent=1 // loop_footer
      %s27 = sadd.s32 1, %s23
    $region7: #{tpu_custom_call.1} parent=1 // loop_footer_branch
      %22 = sbr.rel target = $region3
    $region8: #{tpu_custom_call.1} parent=1 // loop_exit
      _
    %915 = vsyncpa [#allocation3], 1
    %s916 = scalar_lea.sflag [#allocation3], 1
    %917 = vsyncpa %s916, 1
    %918 = vsyncpa [#allocation7], 1
    %s919 = scalar_lea.sflag [#allocation7], 1
    %920 = vsyncpa %s919, 1
    %921 = vsyncpa [#allocation4], 1
    %s922 = scalar_lea.sflag [#allocation4], 1
    %923 = vsyncpa %s922, 1

</llo_original>
